<compile_context>
chip_gen: v6e
topology: v6e:2x2x1
jax: 0.10.0
libtpu: 0.0.40
codegen_flags: <defaults>
</compile_context>

<pallas_src>
import math

import jax
import jax.numpy as jnp
from jax.experimental import pallas as pl
from jax.experimental.pallas import tpu as pltpu

IN_DIM = 4
HID_DIM = 128
OUT_DIM = 2


def pg_forward_kernel(x_ref, w1_ref, b1_ref, w2d_ref, b2d_ref, o_ref):
    xT = x_ref[...]                      # (4, Bm)  batch on lanes -> dense vregs

    # linear1 on the MXU: (128, 4) @ (4, Bm) -> (128, Bm) + bias.
    # K=4 utilization of the MXU is low, but the vex slot is otherwise idle and
    # this frees all 4 VALU slots (previously ~8 VPU ops per hidden element).
    # f32 inputs are kept for the 1e-5 tolerance; bf16-in/f32-acc would cut the
    # multi-pass MXU work on v6e/v7x if the tolerance were relaxed.
    h = jnp.dot(w1_ref[...], xT, preferred_element_type=jnp.float32) + b1_ref[...]

    # dropout(p=0.6): identity in eval/inference mode.
    # TODO(synk): training-mode dropout would need pltpu.prng_seed /
    #             pltpu.prng_random_bits masking with 1/(1-p) rescaling.
    h = jnp.maximum(h, 0.0)              # relu

    # linear2 folded into a logit-difference matvec:
    #   d = (w2[1]-w2[0]) @ h + (b2[1]-b2[0])   -> (1, Bm)
    # Halves the layer-2 MXU work and drops the sublane subtract + concat.
    d = jnp.dot(w2d_ref[...], h, preferred_element_type=jnp.float32) + b2d_ref[...]

    # 2-class softmax closed form (one EUP exp, no cross-lane reduce):
    #   p1 = sigmoid(d), p0 = 1 - p1
    p1 = 1.0 / (1.0 + jnp.exp(-d))
    o_ref[1:2, :] = p1.astype(o_ref.dtype)
    o_ref[0:1, :] = (1.0 - p1).astype(o_ref.dtype)


def _round_up(n, m):
    return ((n + m - 1) // m) * m


def _cdiv(a, b):
    return -(-a // b)


def pg_network_forward(x, w1, b1, w2, b2, *, block_b=8192):
    """x: (B, 4) f32; weights in PyTorch nn.Linear layout.  Returns (B, 2) probs."""
    B = x.shape[0]
    # Defensive: the batch block must be a positive multiple of 128 lanes.
    block_b = max(128, _round_up(block_b, 128))

    # Pick the number of batch blocks so that
    #  * each block is at most block_b lanes (amortizes ~0.35us per grid step),
    #  * the batch splits as evenly as possible (no near-empty padded block),
    #  * there are >= 2 blocks once B is big enough, so the "parallel" axis
    #    actually shards across both TensorCores on v7x.
    n_blocks = max(1, _cdiv(B, block_b))
    if B > 256:
        n_blocks = max(n_blocks, 2)
    Bm = _round_up(_cdiv(B, n_blocks), 128)
    Bp = Bm * n_blocks
    # VMEM footprint per block at Bm=8192: h strip ~4 MiB + small in/out buffers,
    # comfortably inside the 16 MiB scoped default even on v5e.

    # Lane-dense transposed input, zero-padded up to the block multiple
    # (single fused pad-of-transpose; padded columns are sliced off below).
    xT = jnp.pad(x.astype(jnp.float32).T, ((0, 0), (0, Bp - B)))
    b1c = b1.reshape(HID_DIM, 1).astype(jnp.float32)
    # Fold linear2 + 2-class softmax into a single logit-difference row.
    w2d = (w2[1] - w2[0]).reshape(1, HID_DIM).astype(jnp.float32)
    b2d = (b2[1] - b2[0]).reshape(1, 1).astype(jnp.float32)

    outT = pl.pallas_call(
        pg_forward_kernel,
        out_shape=jax.ShapeDtypeStruct((OUT_DIM, Bp), jnp.float32),
        grid=(n_blocks,),
        in_specs=[
            pl.BlockSpec((IN_DIM, Bm), lambda i: (0, i)),        # xT: blocked over batch
            pl.BlockSpec((HID_DIM, IN_DIM), lambda i: (0, 0)),   # w1: resident
            pl.BlockSpec((HID_DIM, 1), lambda i: (0, 0)),        # b1
            pl.BlockSpec((1, HID_DIM), lambda i: (0, 0)),        # w2 logit-diff row
            pl.BlockSpec((1, 1), lambda i: (0, 0)),              # b2 logit-diff
        ],
        out_specs=pl.BlockSpec((OUT_DIM, Bm), lambda i: (0, i)),
        compiler_params=pltpu.CompilerParams(
            # independent batch blocks -> shard across both TensorCores on v7x
            dimension_semantics=("parallel",)),
    )(xT, w1.astype(jnp.float32), b1c, w2d, b2d)

    # TODO(synk): callers that can supply feature-major (4, B) inputs and consume
    #             (2, B) probs could drop both wrapper transposes (each is a
    #             separate HBM round trip that dominates at small B).
    return outT[:, :B].T


def init_params(key):
    """Deterministic init mimicking PyTorch nn.Linear default (+/- 1/sqrt(fan_in)),
    stored in PyTorch (out_features, in_features) layout."""
    k1, k2, k3, k4 = jax.random.split(key, 4)
    bound1 = 1.0 / math.sqrt(IN_DIM)
    bound2 = 1.0 / math.sqrt(HID_DIM)
    w1 = jax.random.uniform(k1, (HID_DIM, IN_DIM), jnp.float32, -bound1, bound1)
    b1 = jax.random.uniform(k2, (HID_DIM,), jnp.float32, -bound1, bound1)
    w2 = jax.random.uniform(k3, (OUT_DIM, HID_DIM), jnp.float32, -bound2, bound2)
    b2 = jax.random.uniform(k4, (OUT_DIM,), jnp.float32, -bound2, bound2)
    return w1, b1, w2, b2


def reference_forward(x, w1, b1, w2, b2):
    h = jnp.maximum(x @ w1.T + b1, 0.0)
    s = h @ w2.T + b2
    return jax.nn.softmax(s, axis=1)


if __name__ == "__main__":
    key = jax.random.PRNGKey(0)
    kx, kp = jax.random.split(key)
    B = 8
    x = jax.random.normal(kx, (B, IN_DIM), jnp.float32)
    w1, b1, w2, b2 = init_params(kp)

    out = pg_network_forward(x, w1, b1, w2, b2)
    out = jax.block_until_ready(out)

    ref = reference_forward(x, w1, b1, w2, b2)
    assert out.shape == (B, OUT_DIM), out.shape
    assert jnp.allclose(out, ref, atol=1e-5, rtol=1e-5), (out, ref)
    assert jnp.allclose(jnp.sum(out, axis=1), 1.0, atol=1e-5)

    print("KERNEL_OK")
</pallas_src>

<mosaic_0001>
module attributes {stable_mosaic.version = 11 : i64} {
  func.func @pg_forward_kernel(%arg0: i32, %arg1: memref<4x128xf32, #tpu.memory_space<vmem>>, %arg2: memref<128x4xf32, #tpu.memory_space<vmem>>, %arg3: memref<128x1xf32, #tpu.memory_space<vmem>>, %arg4: memref<1x128xf32, #tpu.memory_space<vmem>>, %arg5: memref<1x1xf32, #tpu.memory_space<vmem>>, %arg6: memref<2x128xf32, #tpu.memory_space<vmem>>) attributes {dimension_semantics = [#tpu.dimension_semantics<parallel>], iteration_bounds = array<i64: 1>, scalar_prefetch = 0 : i64, scratch_operands = 0 : i64, tpu.core_type = #tpu.core_type<tc>, window_params = [{transform_indices = @transform_0, window_bounds = array<i64: 4, 128>}, {pipeline_mode = #tpu.pipeline_mode<synchronous>, transform_indices = @transform_1, window_bounds = array<i64: 128, 4>}, {pipeline_mode = #tpu.pipeline_mode<synchronous>, transform_indices = @transform_2, window_bounds = array<i64: 128, 1>}, {pipeline_mode = #tpu.pipeline_mode<synchronous>, transform_indices = @transform_3, window_bounds = array<i64: 1, 128>}, {pipeline_mode = #tpu.pipeline_mode<synchronous>, transform_indices = @transform_4, window_bounds = array<i64: 1, 1>}, {transform_indices = @transform_5, window_bounds = array<i64: 2, 128>}]} {
    %c0 = arith.constant 0 : index
    %c0_0 = arith.constant 0 : index
    %0 = vector.load %arg1[%c0, %c0_0] : memref<4x128xf32, #tpu.memory_space<vmem>>, vector<4x128xf32>
    %c0_1 = arith.constant 0 : index
    %c0_2 = arith.constant 0 : index
    %1 = vector.load %arg2[%c0_1, %c0_2] : memref<128x4xf32, #tpu.memory_space<vmem>>, vector<128x4xf32>
    %cst = arith.constant dense<0.000000e+00> : vector<128x128xf32>
    %2 = tpu.matmul %1, %0, %cst {dimension_numbers = #tpu.dot_dimension_numbers<[1], [0], [0], [1], [0, 0, 1, 1], [], []>} : vector<128x4xf32>, vector<4x128xf32>, vector<128x128xf32> -> vector<128x128xf32>
    %c0_3 = arith.constant 0 : index
    %c0_4 = arith.constant 0 : index
    %3 = vector.load %arg3[%c0_3, %c0_4] : memref<128x1xf32, #tpu.memory_space<vmem>>, vector<128x1xf32>
    %4 = vector.broadcast %3 : vector<128x1xf32> to vector<128x128xf32>
    %5 = arith.addf %2, %4 : vector<128x128xf32>
    %cst_5 = arith.constant 0.000000e+00 : f32
    %6 = vector.broadcast %cst_5 : f32 to vector<128x128xf32>
    %7 = arith.maximumf %5, %6 : vector<128x128xf32>
    %c0_6 = arith.constant 0 : index
    %c0_7 = arith.constant 0 : index
    %8 = vector.load %arg4[%c0_6, %c0_7] : memref<1x128xf32, #tpu.memory_space<vmem>>, vector<1x128xf32>
    %cst_8 = arith.constant dense<0.000000e+00> : vector<1x128xf32>
    %9 = tpu.matmul %8, %7, %cst_8 {dimension_numbers = #tpu.dot_dimension_numbers<[1], [0], [0], [1], [0, 0, 1, 1], [], []>} : vector<1x128xf32>, vector<128x128xf32>, vector<1x128xf32> -> vector<1x128xf32>
    %c0_9 = arith.constant 0 : index
    %c0_10 = arith.constant 0 : index
    %10 = vector.load %arg5[%c0_9, %c0_10] : memref<1x1xf32, #tpu.memory_space<vmem>>, vector<1x1xf32>
    %11 = vector.broadcast %10 : vector<1x1xf32> to vector<1x128xf32>
    %12 = arith.addf %9, %11 : vector<1x128xf32>
    %cst_11 = arith.constant 0.000000e+00 : f32
    %13 = vector.broadcast %cst_11 : f32 to vector<1x128xf32>
    %14 = arith.subf %13, %12 : vector<1x128xf32>
    %15 = math.exp %14 : vector<1x128xf32>
    %cst_12 = arith.constant 1.000000e+00 : f32
    %16 = vector.broadcast %cst_12 : f32 to vector<1x128xf32>
    %17 = arith.addf %16, %15 : vector<1x128xf32>
    %cst_13 = arith.constant 1.000000e+00 : f32
    %18 = vector.broadcast %cst_13 : f32 to vector<1x128xf32>
    %19 = arith.divf %18, %17 : vector<1x128xf32>
    %c1 = arith.constant 1 : index
    %c0_14 = arith.constant 0 : index
    %20 = vector.load %arg6[%c1, %c0_14] : memref<2x128xf32, #tpu.memory_space<vmem>>, vector<1x128xf32>
    tpu.vector_store %arg6[%c1, %c0_14], %19 {strides = array<i32>} : memref<2x128xf32, #tpu.memory_space<vmem>>, vector<1x128xf32>,
    %cst_15 = arith.constant 1.000000e+00 : f32
    %21 = vector.broadcast %cst_15 : f32 to vector<1x128xf32>
    %22 = arith.subf %21, %19 : vector<1x128xf32>
    %c0_16 = arith.constant 0 : index
    %c0_17 = arith.constant 0 : index
    %23 = vector.load %arg6[%c0_16, %c0_17] : memref<2x128xf32, #tpu.memory_space<vmem>>, vector<1x128xf32>
    tpu.vector_store %arg6[%c0_16, %c0_17], %22 {strides = array<i32>} : memref<2x128xf32, #tpu.memory_space<vmem>>, vector<1x128xf32>,
    return
  }
  func.func @transform_0(%arg0: i32) -> (i32, i32) {
    %c0_i32 = arith.constant 0 : i32
    %c0_i32_0 = arith.constant 0 : i32
    return %c0_i32, %arg0 : i32, i32
  }
  func.func @transform_1(%arg0: i32) -> (i32, i32) {
    %c0_i32 = arith.constant 0 : i32
    %c0_i32_0 = arith.constant 0 : i32
    %c0_i32_1 = arith.constant 0 : i32
    return %c0_i32, %c0_i32_0 : i32, i32
  }
  func.func @transform_2(%arg0: i32) -> (i32, i32) {
    %c0_i32 = arith.constant 0 : i32
    %c0_i32_0 = arith.constant 0 : i32
    %c0_i32_1 = arith.constant 0 : i32
    return %c0_i32, %c0_i32_0 : i32, i32
  }
  func.func @transform_3(%arg0: i32) -> (i32, i32) {
    %c0_i32 = arith.constant 0 : i32
    %c0_i32_0 = arith.constant 0 : i32
    %c0_i32_1 = arith.constant 0 : i32
    return %c0_i32, %c0_i32_0 : i32, i32
  }
  func.func @transform_4(%arg0: i32) -> (i32, i32) {
    %c0_i32 = arith.constant 0 : i32
    %c0_i32_0 = arith.constant 0 : i32
    %c0_i32_1 = arith.constant 0 : i32
    return %c0_i32, %c0_i32_0 : i32, i32
  }
  func.func @transform_5(%arg0: i32) -> (i32, i32) {
    %c0_i32 = arith.constant 0 : i32
    %c0_i32_0 = arith.constant 0 : i32
    return %c0_i32, %arg0 : i32, i32
  }
}

</mosaic_0001>

<llo_original>
// kernel: tpu_custom_call.1
$region0: #{tpu_custom_call.1}
  #allocation0 [shape = 'u32[]', space=smem, size = 0x4, offset = 0x4, fixed_abs, tag = 'smem constant byte address 0x4 - core index']
  #allocation1 [shape = 'u32[144,128]{1,0:T(1,128)}', space=vmem, size = 0x12000, scoped, tag = 'internal scratch']
  #allocation2 [shape = 'f32[1,1]{1,0:T(1,128)S(1)}', space=vmem, size = 0x200, scoped, tag = 'scoped memory for tpu_custom_call.1']
  %s0 = inlined_call_operand.vmem [shape: f32[4,128], index: 0, kind: input, shape index: {}]
  %s1 = inlined_call_operand.vmem [shape: f32[128,4], index: 1, kind: input, shape index: {}]
  %s2 = inlined_call_operand.vmem [shape: f32[128,1], index: 2, kind: input, shape index: {}]
  %s3 = inlined_call_operand.vmem [shape: f32[1,128], index: 3, kind: input, shape index: {}]
  %s4 = inlined_call_operand.<no memory space> [shape: f32[1,1], index: 4, kind: input, shape index: {}]
  %s5 = inlined_call_operand.hbm [shape: f32[2,128], index: 5, kind: output, shape index: {}]
  %s6 = sld [smem:[#allocation0]]
  $region30: #{tpu_custom_call.1} parent=0
    _
  %s8 = ssub.s32 1, %s6
  %s9 = scalar_select 0, %s8, %s6
  %v10 = vstv %s4
  %11 = vst [vmem:[#allocation2] sm:$0x1] %v10
  $region1: #{tpu_custom_call.1} parent=0
    #allocation3 [shape = 'u8[1024]{0}', space=vmem, size = 0x400, scoped, tag = 'output window, operand 0, single buffered']
    #allocation4 [shape = 's32[1]{0}', space=sflag, size = 0x4, scoped, tag = 'scoped memory for tpu_custom_call.1']
    %12 = vsyncpa [#allocation4], 0
    // Predicated region
    $region2: #{tpu_custom_call.1} parent=1 // pred_check
      _
    $region3: #{tpu_custom_call.1} parent=1 // pred_check_branch
      %14 = sbr.rel (0) target = $region5
    $region4: #{tpu_custom_call.1} parent=1 // pred_region
      _
    $region5: #{tpu_custom_call.1} parent=1 // pred_fallthru
      _
    // Predicated region
    $region6: #{tpu_custom_call.1} parent=1 // pred_check
      _
    $region7: #{tpu_custom_call.1} parent=1 // pred_check_branch
      %16 = sbr.rel (0) target = $region9
    $region8: #{tpu_custom_call.1} parent=1 // pred_region
      _
    $region9: #{tpu_custom_call.1} parent=1 // pred_fallthru
      _
    // Predicated region
    $region10: #{tpu_custom_call.1} parent=1 // pred_check
      _
    $region11: #{tpu_custom_call.1} parent=1 // pred_check_branch
      %18 = sbr.rel (0) target = $region13
    $region12: #{tpu_custom_call.1} parent=1 // pred_region
      _
    $region13: #{tpu_custom_call.1} parent=1 // pred_fallthru
      _
    // Predicated region
    $region14: #{tpu_custom_call.1} parent=1 // pred_check
      _
    $region15: #{tpu_custom_call.1} parent=1 // pred_check_branch
      %20 = sbr.rel (0) target = $region17
    $region16: #{tpu_custom_call.1} parent=1 // pred_region
      _
    $region17: #{tpu_custom_call.1} parent=1 // pred_fallthru
      _
    // Predicated region
    $region18: #{tpu_custom_call.1} parent=1 // pred_check
      _
    $region19: #{tpu_custom_call.1} parent=1 // pred_check_branch
      %22 = sbr.rel (0) target = $region21
    $region20: #{tpu_custom_call.1} parent=1 // pred_region
      _
    $region21: #{tpu_custom_call.1} parent=1 // pred_fallthru
      _
    %v23 = vld [vmem:[%s0] sm:$0xf]
    %v24 = vld [vmem:[%s1] sm:$0xff]
    %v25 = vld [vmem:[%s1 + $0x8] sm:$0xff]
    %v26 = vld [vmem:[%s1 + $0x10] sm:$0xff]
    %v27 = vld [vmem:[%s1 + $0x18] sm:$0xff]
    %v28 = vld [vmem:[%s1 + $0x20] sm:$0xff]
    %v29 = vld [vmem:[%s1 + $0x28] sm:$0xff]
    %v30 = vld [vmem:[%s1 + $0x30] sm:$0xff]
    %v31 = vld [vmem:[%s1 + $0x38] sm:$0xff]
    %v32 = vld [vmem:[%s1 + $0x40] sm:$0xff]
    %v33 = vld [vmem:[%s1 + $0x48] sm:$0xff]
    %v34 = vld [vmem:[%s1 + $0x50] sm:$0xff]
    %v35 = vld [vmem:[%s1 + $0x58] sm:$0xff]
    %v36 = vld [vmem:[%s1 + $0x60] sm:$0xff]
    %v37 = vld [vmem:[%s1 + $0x68] sm:$0xff]
    %v38 = vld [vmem:[%s1 + $0x70] sm:$0xff]
    %v39 = vld [vmem:[%s1 + $0x78] sm:$0xff]
    %v40 = vld [vmem:[%s2] sm:$0xff]
    %v41 = vld [vmem:[%s2 + $0x8] sm:$0xff]
    %v42 = vld [vmem:[%s2 + $0x10] sm:$0xff]
    %v43 = vld [vmem:[%s2 + $0x18] sm:$0xff]
    %v44 = vld [vmem:[%s2 + $0x20] sm:$0xff]
    %v45 = vld [vmem:[%s2 + $0x28] sm:$0xff]
    %v46 = vld [vmem:[%s2 + $0x30] sm:$0xff]
    %v47 = vld [vmem:[%s2 + $0x38] sm:$0xff]
    %v48 = vld [vmem:[%s2 + $0x40] sm:$0xff]
    %v49 = vld [vmem:[%s2 + $0x48] sm:$0xff]
    %v50 = vld [vmem:[%s2 + $0x50] sm:$0xff]
    %v51 = vld [vmem:[%s2 + $0x58] sm:$0xff]
    %v52 = vld [vmem:[%s2 + $0x60] sm:$0xff]
    %v53 = vld [vmem:[%s2 + $0x68] sm:$0xff]
    %v54 = vld [vmem:[%s2 + $0x70] sm:$0xff]
    %v55 = vld [vmem:[%s2 + $0x78] sm:$0xff]
    %57 = vset.pattern.permute.xlu0 0
    %58 = vperm.xlu0 %57, %v40
    %v59 = vpop.permute.xlu0 %58
    %62 = vset.pattern.permute.xlu0 0
    %63 = vperm.xlu0 %62, %v41
    %v64 = vpop.permute.xlu0 %63
    %67 = vset.pattern.permute.xlu0 0
    %68 = vperm.xlu0 %67, %v42
    %v69 = vpop.permute.xlu0 %68
    %72 = vset.pattern.permute.xlu0 0
    %73 = vperm.xlu0 %72, %v43
    %v74 = vpop.permute.xlu0 %73
    %77 = vset.pattern.permute.xlu0 0
    %78 = vperm.xlu0 %77, %v44
    %v79 = vpop.permute.xlu0 %78
    %82 = vset.pattern.permute.xlu0 0
    %83 = vperm.xlu0 %82, %v45
    %v84 = vpop.permute.xlu0 %83
    %87 = vset.pattern.permute.xlu0 0
    %88 = vperm.xlu0 %87, %v46
    %v89 = vpop.permute.xlu0 %88
    %92 = vset.pattern.permute.xlu0 0
    %93 = vperm.xlu0 %92, %v47
    %v94 = vpop.permute.xlu0 %93
    %97 = vset.pattern.permute.xlu0 0
    %98 = vperm.xlu0 %97, %v48
    %v99 = vpop.permute.xlu0 %98
    %102 = vset.pattern.permute.xlu0 0
    %103 = vperm.xlu0 %102, %v49
    %v104 = vpop.permute.xlu0 %103
    %107 = vset.pattern.permute.xlu0 0
    %108 = vperm.xlu0 %107, %v50
    %v109 = vpop.permute.xlu0 %108
    %112 = vset.pattern.permute.xlu0 0
    %113 = vperm.xlu0 %112, %v51
    %v114 = vpop.permute.xlu0 %113
    %117 = vset.pattern.permute.xlu0 0
    %118 = vperm.xlu0 %117, %v52
    %v119 = vpop.permute.xlu0 %118
    %122 = vset.pattern.permute.xlu0 0
    %123 = vperm.xlu0 %122, %v53
    %v124 = vpop.permute.xlu0 %123
    %127 = vset.pattern.permute.xlu0 0
    %128 = vperm.xlu0 %127, %v54
    %v129 = vpop.permute.xlu0 %128
    %132 = vset.pattern.permute.xlu0 0
    %133 = vperm.xlu0 %132, %v55
    %v134 = vpop.permute.xlu0 %133
    %vm136 = vcmask 31744
    %v138 = vsel %vm136, %v24, 0
    %v141 = vsel %vm136, %v25, 0
    %v144 = vsel %vm136, %v26, 0
    %v147 = vsel %vm136, %v27, 0
    %v150 = vsel %vm136, %v28, 0
    %v153 = vsel %vm136, %v29, 0
    %v156 = vsel %vm136, %v30, 0
    %v159 = vsel %vm136, %v31, 0
    %v162 = vsel %vm136, %v32, 0
    %v165 = vsel %vm136, %v33, 0
    %v168 = vsel %vm136, %v34, 0
    %v171 = vsel %vm136, %v35, 0
    %v174 = vsel %vm136, %v36, 0
    %v177 = vsel %vm136, %v37, 0
    %v180 = vsel %vm136, %v38, 0
    %v183 = vsel %vm136, %v39, 0
    %vm185 = vcmask 1043456
    %v187 = vsel %vm185, %v23, 0
    %189 = vmatprep.subr.mxu0 0.0
    %190 = vmatpush1.msra.mxu0 0.0
    %191 = vmatprep.subr.mxu0 0.0
    %192 = vmatpush1.msra.mxu0 0.0
    %193 = vmatprep.subr.mxu0 0.0
    %194 = vmatpush1.msra.mxu0 0.0
    %195 = vmatprep.subr.mxu0 0.0
    %196 = vmatpush1.msra.mxu0 0.0
    %197 = vmatprep.subr.mxu0 0.0
    %198 = vmatpush1.msra.mxu0 0.0
    %199 = vmatprep.subr.mxu0 0.0
    %200 = vmatpush1.msra.mxu0 0.0
    %201 = vmatprep.subr.mxu0 0.0
    %202 = vmatpush1.msra.mxu0 0.0
    %203 = vmatprep.subr.mxu0 0.0
    %204 = vmatpush1.msra.mxu0 0.0
    %205 = vmatprep.subr.mxu0 0.0
    %206 = vmatpush1.msra.mxu0 0.0
    %207 = vmatprep.subr.mxu0 0.0
    %208 = vmatpush1.msra.mxu0 0.0
    %209 = vmatprep.subr.mxu0 0.0
    %210 = vmatpush1.msra.mxu0 0.0
    %211 = vmatprep.subr.mxu0 0.0
    %212 = vmatpush1.msra.mxu0 0.0
    %213 = vmatprep.subr.mxu0 0.0
    %214 = vmatpush1.msra.mxu0 0.0
    %215 = vmatprep.subr.mxu0 0.0
    %216 = vmatpush1.msra.mxu0 0.0
    %217 = vmatprep.subr.mxu0 0.0
    %218 = vmatpush1.msra.mxu0 0.0
    %219 = vmatprep.subr.mxu0 0.0
    %220 = vmatpush1.msra.mxu0 %v187
    %221 = vmatprep.subr.mxu0 0.0
    %222 = vmatpush2.msra.mxu0 0.0
    %223 = vmatprep.subr.mxu0 0.0
    %224 = vmatpush2.msra.mxu0 0.0
    %225 = vmatprep.subr.mxu0 0.0
    %226 = vmatpush2.msra.mxu0 0.0
    %227 = vmatprep.subr.mxu0 0.0
    %228 = vmatpush2.msra.mxu0 0.0
    %229 = vmatprep.subr.mxu0 0.0
    %230 = vmatpush2.msra.mxu0 0.0
    %231 = vmatprep.subr.mxu0 0.0
    %232 = vmatpush2.msra.mxu0 0.0
    %233 = vmatprep.subr.mxu0 0.0
    %234 = vmatpush2.msra.mxu0 0.0
    %235 = vmatprep.subr.mxu0 0.0
    %236 = vmatpush2.msra.mxu0 0.0
    %237 = vmatprep.subr.mxu0 0.0
    %238 = vmatpush2.msra.mxu0 0.0
    %239 = vmatprep.subr.mxu0 0.0
    %240 = vmatpush2.msra.mxu0 0.0
    %241 = vmatprep.subr.mxu0 0.0
    %242 = vmatpush2.msra.mxu0 0.0
    %243 = vmatprep.subr.mxu0 0.0
    %244 = vmatpush2.msra.mxu0 0.0
    %245 = vmatprep.subr.mxu0 0.0
    %246 = vmatpush2.msra.mxu0 0.0
    %247 = vmatprep.subr.mxu0 0.0
    %248 = vmatpush2.msra.mxu0 0.0
    %249 = vmatprep.subr.mxu0 0.0
    %250 = vmatpush2.msra.mxu0 0.0
    %251 = vmatprep.subr.mxu0 0.0
    %252 = vmatpush2.msra.mxu0 0.0
    %253 = vmatprep.mubr.f32.mxu0 0.0
    %254 = vmatmul.mubr.f32.gmra.mxu0 %v138
    %v255 = vpop.f32.mrf.mxu0
    %v256 = vadd.f32 %v59, %v255
    %v257 = vpop.f32.mrf.mxu0
    %258 = vmatprep.mubr.f32.mxu0 0.0
    %259 = vmatmul.mubr.f32.gmra.mxu0 %v141
    %v260 = vpop.f32.mrf.mxu0
    %v261 = vadd.f32 %v64, %v260
    %v262 = vpop.f32.mrf.mxu0
    %263 = vmatprep.mubr.f32.mxu0 0.0
    %264 = vmatmul.mubr.f32.gmra.mxu0 %v144
    %v265 = vpop.f32.mrf.mxu0
    %v266 = vadd.f32 %v69, %v265
    %v267 = vpop.f32.mrf.mxu0
    %268 = vmatprep.mubr.f32.mxu0 0.0
    %269 = vmatmul.mubr.f32.gmra.mxu0 %v147
    %v270 = vpop.f32.mrf.mxu0
    %v271 = vadd.f32 %v74, %v270
    %v272 = vpop.f32.mrf.mxu0
    %273 = vmatprep.mubr.f32.mxu0 0.0
    %274 = vmatmul.mubr.f32.gmra.mxu0 %v150
    %v275 = vpop.f32.mrf.mxu0
    %v276 = vadd.f32 %v79, %v275
    %v277 = vpop.f32.mrf.mxu0
    %278 = vmatprep.mubr.f32.mxu0 0.0
    %279 = vmatmul.mubr.f32.gmra.mxu0 %v153
    %v280 = vpop.f32.mrf.mxu0
    %v281 = vadd.f32 %v84, %v280
    %v282 = vpop.f32.mrf.mxu0
    %283 = vmatprep.mubr.f32.mxu0 0.0
    %284 = vmatmul.mubr.f32.gmra.mxu0 %v156
    %v285 = vpop.f32.mrf.mxu0
    %v286 = vadd.f32 %v89, %v285
    %v287 = vpop.f32.mrf.mxu0
    %288 = vmatprep.mubr.f32.mxu0 0.0
    %289 = vmatmul.mubr.f32.gmra.mxu0 %v159
    %v290 = vpop.f32.mrf.mxu0
    %v291 = vadd.f32 %v94, %v290
    %v292 = vpop.f32.mrf.mxu0
    %293 = vmatprep.mubr.f32.mxu0 0.0
    %294 = vmatmul.mubr.f32.gmra.mxu0 %v162
    %v295 = vpop.f32.mrf.mxu0
    %v296 = vadd.f32 %v99, %v295
    %v297 = vpop.f32.mrf.mxu0
    %298 = vmatprep.mubr.f32.mxu0 0.0
    %299 = vmatmul.mubr.f32.gmra.mxu0 %v165
    %v300 = vpop.f32.mrf.mxu0
    %v301 = vadd.f32 %v104, %v300
    %v302 = vpop.f32.mrf.mxu0
    %303 = vmatprep.mubr.f32.mxu0 0.0
    %304 = vmatmul.mubr.f32.gmra.mxu0 %v168
    %v305 = vpop.f32.mrf.mxu0
    %v306 = vadd.f32 %v109, %v305
    %v307 = vpop.f32.mrf.mxu0
    %308 = vmatprep.mubr.f32.mxu0 0.0
    %309 = vmatmul.mubr.f32.gmra.mxu0 %v171
    %v310 = vpop.f32.mrf.mxu0
    %v311 = vadd.f32 %v114, %v310
    %v312 = vpop.f32.mrf.mxu0
    %313 = vmatprep.mubr.f32.mxu0 0.0
    %314 = vmatmul.mubr.f32.gmra.mxu0 %v174
    %v315 = vpop.f32.mrf.mxu0
    %v316 = vadd.f32 %v119, %v315
    %v317 = vpop.f32.mrf.mxu0
    %318 = vmatprep.mubr.f32.mxu0 0.0
    %319 = vmatmul.mubr.f32.gmra.mxu0 %v177
    %v320 = vpop.f32.mrf.mxu0
    %v321 = vadd.f32 %v124, %v320
    %v322 = vpop.f32.mrf.mxu0
    %323 = vmatprep.mubr.f32.mxu0 0.0
    %324 = vmatmul.mubr.f32.gmra.mxu0 %v180
    %v325 = vpop.f32.mrf.mxu0
    %v326 = vadd.f32 %v129, %v325
    %v327 = vpop.f32.mrf.mxu0
    %328 = vmatprep.mubr.f32.mxu0 0.0
    %329 = vmatmul.mubr.f32.gmra.mxu0 %v183
    %v330 = vpop.f32.mrf.mxu0
    %v331 = vadd.f32 %v134, %v330
    %v332 = vpop.f32.mrf.mxu0
    %333 = vdwg.mxu0
    %v334 = vmax.f32 %v256, 0.0
    %v335 = vmax.f32 %v261, 0.0
    %v336 = vmax.f32 %v266, 0.0
    %v337 = vmax.f32 %v271, 0.0
    %v338 = vmax.f32 %v276, 0.0
    %v339 = vmax.f32 %v281, 0.0
    %v340 = vmax.f32 %v286, 0.0
    %v341 = vmax.f32 %v291, 0.0
    %v342 = vmax.f32 %v296, 0.0
    %v343 = vmax.f32 %v301, 0.0
    %v344 = vmax.f32 %v306, 0.0
    %v345 = vmax.f32 %v311, 0.0
    %v346 = vmax.f32 %v316, 0.0
    %v347 = vmax.f32 %v321, 0.0
    %v348 = vmax.f32 %v326, 0.0
    %v349 = vmax.f32 %v331, 0.0
    %v350 = vld [vmem:[%s3] sm:$0x1]
    %v351 = vld [vmem:[#allocation2] sm:$0x1]
    %353 = vset.pattern.permute.xlu0 0
    %354 = vperm.xlu0 %353, %v351
    %v355 = vpop.permute.xlu0 %354
    %v357 = vlaneseq
    %v358 = vshrl.u32 %v357, 7
    %v359 = vsub.s32 0, %v358
    %v360 = vrot.slane %v355, %v359
    %361 = vmatprep.subr.mxu0 0.0
    %362 = vmatpush1.msra.mxu0 %v349
    %363 = vmatprep.subr.mxu0 0.0
    %364 = vmatpush1.msra.mxu0 %v348
    %365 = vmatprep.subr.mxu0 0.0
    %366 = vmatpush1.msra.mxu0 %v347
    %367 = vmatprep.subr.mxu0 0.0
    %368 = vmatpush1.msra.mxu0 %v346
    %369 = vmatprep.subr.mxu0 0.0
    %370 = vmatpush1.msra.mxu0 %v345
    %371 = vmatprep.subr.mxu0 0.0
    %372 = vmatpush1.msra.mxu0 %v344
    %373 = vmatprep.subr.mxu0 0.0
    %374 = vmatpush1.msra.mxu0 %v343
    %375 = vmatprep.subr.mxu0 0.0
    %376 = vmatpush1.msra.mxu0 %v342
    %377 = vmatprep.subr.mxu0 0.0
    %378 = vmatpush1.msra.mxu0 %v341
    %379 = vmatprep.subr.mxu0 0.0
    %380 = vmatpush1.msra.mxu0 %v340
    %381 = vmatprep.subr.mxu0 0.0
    %382 = vmatpush1.msra.mxu0 %v339
    %383 = vmatprep.subr.mxu0 0.0
    %384 = vmatpush1.msra.mxu0 %v338
    %385 = vmatprep.subr.mxu0 0.0
    %386 = vmatpush1.msra.mxu0 %v337
    %387 = vmatprep.subr.mxu0 0.0
    %388 = vmatpush1.msra.mxu0 %v336
    %389 = vmatprep.subr.mxu0 0.0
    %390 = vmatpush1.msra.mxu0 %v335
    %391 = vmatprep.subr.mxu0 0.0
    %392 = vmatpush1.msra.mxu0 %v334
    %393 = vmatprep.subr.mxu0 0.0
    %394 = vmatpush2.msra.mxu0 0.0
    %395 = vmatprep.subr.mxu0 0.0
    %396 = vmatpush2.msra.mxu0 0.0
    %397 = vmatprep.subr.mxu0 0.0
    %398 = vmatpush2.msra.mxu0 0.0
    %399 = vmatprep.subr.mxu0 0.0
    %400 = vmatpush2.msra.mxu0 0.0
    %401 = vmatprep.subr.mxu0 0.0
    %402 = vmatpush2.msra.mxu0 0.0
    %403 = vmatprep.subr.mxu0 0.0
    %404 = vmatpush2.msra.mxu0 0.0
    %405 = vmatprep.subr.mxu0 0.0
    %406 = vmatpush2.msra.mxu0 0.0
    %407 = vmatprep.subr.mxu0 0.0
    %408 = vmatpush2.msra.mxu0 0.0
    %409 = vmatprep.subr.mxu0 0.0
    %410 = vmatpush2.msra.mxu0 0.0
    %411 = vmatprep.subr.mxu0 0.0
    %412 = vmatpush2.msra.mxu0 0.0
    %413 = vmatprep.subr.mxu0 0.0
    %414 = vmatpush2.msra.mxu0 0.0
    %415 = vmatprep.subr.mxu0 0.0
    %416 = vmatpush2.msra.mxu0 0.0
    %417 = vmatprep.subr.mxu0 0.0
    %418 = vmatpush2.msra.mxu0 0.0
    %419 = vmatprep.subr.mxu0 0.0
    %420 = vmatpush2.msra.mxu0 0.0
    %421 = vmatprep.subr.mxu0 0.0
    %422 = vmatpush2.msra.mxu0 0.0
    %423 = vmatprep.subr.mxu0 0.0
    %424 = vmatpush2.msra.mxu0 0.0
    %425 = vmatprep.mubr.f32.mxu0 0.0
    %426 = vmatmul.mubr.f32.gmra.mxu0 %v350
    %v427 = vpop.f32.mrf.mxu0
    %v428 = vadd.f32 %v360, %v427
    %v429 = vpop.f32.mrf.mxu0
    %430 = vdwg.mxu0
    %v431 = vsub.f32 0.0, %v428
    %v432 = vmul.f32 %v431, 1.442695
    %v433 = vpow.pop %v432
    %v434 = vadd.f32 %v433, 1.0
    %v435 = vrcp.pop %v434
    %v436 = vmul.f32 1.0, %v435
    %437 = vst [vmem:[#allocation3 + $0x1] sm:$0x1] %v436
    %v438 = vsub.f32 1.0, %v436
    %439 = vst [vmem:[#allocation3] sm:$0x1] %v438
    // Predicated region
    $region22: #{tpu_custom_call.1} parent=1 // pred_check
      _
    $region23: #{tpu_custom_call.1} parent=1 // pred_check_branch
      %441 = sbr.rel (0) target = $region25
    $region24: #{tpu_custom_call.1} parent=1 // pred_region
      %s443 = ssub.s32 32, 32
      %444 = vsyncadd [#allocation4], %s443
      %s446 = sshll.u32 [#allocation3], 4
      %s447 = int_to_ptr.vmem [resolvable:$true] %s446
      %449 = dma.vmem_to_hbm [thread:$0]  %s447, 32, %s5, [#allocation4]
    $region25: #{tpu_custom_call.1} parent=1 // pred_fallthru
      _
    // Predicated region
    $region26: #{tpu_custom_call.1} parent=1 // pred_check
      _
    $region27: #{tpu_custom_call.1} parent=1 // pred_check_branch
      %451 = sbr.rel (0) target = $region29
    $region28: #{tpu_custom_call.1} parent=1 // pred_region
      %452 = dma.done [#allocation4], 32
    $region29: #{tpu_custom_call.1} parent=1 // pred_fallthru
      _
    %453 = vsyncpa [#allocation4], 1

</llo_original>
